<compile_context>
chip_gen: v6e
topology: v6e:2x2x1
jax: 0.10.0
libtpu: 0.0.40
codegen_flags: <defaults>
</compile_context>

<pallas_src>
import jax
import jax.numpy as jnp
from jax.experimental import pallas as pl
from jax.experimental.pallas import tpu as pltpu

_LANE = 128
# Single-buffer byte budget for one (input + output) pixel tile. Double
# buffering doubles this, so ~12 MiB total — safe under v5e's 16 MiB default
# scoped VMEM and well under v6e/v7x limits.
_PER_BUFFER_BUDGET = 6 * 1024 * 1024


def _outconv_kernel(w_ref, b_ref, x_ref, o_ref):
    # w_ref: SMEM (Cout*Cin,) f32   b_ref: SMEM (Cout,) f32
    # x_ref: VMEM (nb, Cin, T)      o_ref: VMEM (nb, Cout, T)
    cin = x_ref.shape[1]
    cout = o_ref.shape[1]
    # Fully unrolled VPU broadcast-MAC: acc[o] = b[o] + sum_c w[o,c] * x[:,c,:]
    for o in range(cout):
        acc = x_ref[:, 0, :].astype(jnp.float32) * w_ref[o * cin + 0] + b_ref[o]
        for c in range(1, cin):
            acc = acc + x_ref[:, c, :].astype(jnp.float32) * w_ref[o * cin + c]
        o_ref[:, o, :] = acc.astype(o_ref.dtype)


def _pick_tiles(N, Cin, Cout, HW, itemsize):
    """Choose (images per step, pixels per step) for an HBM-streaming 1x1 conv.

    Targets multi-MiB grid steps (to amortize the fixed per-step cost) while
    keeping the double-buffered VMEM footprint generation-safe, and guarantees
    >= 2 parallel grid steps when the problem allows (v7x 2-TensorCore split).
    """
    bytes_per_pixel = (Cin + Cout) * itemsize
    max_pixels = max(_LANE, _PER_BUFFER_BUDGET // bytes_per_pixel)

    if HW > max_pixels:
        t_hw = (max_pixels // _LANE) * _LANE   # 128-multiple tile, ragged tail OK
        nb = 1
    else:
        t_hw = HW                              # whole image row (full-extent block)
        nb = max(1, min(N, max_pixels // max(HW, 1)))

    def n_steps(nb_, t_):
        return (-(-N // nb_)) * (-(-HW // t_))

    if n_steps(nb, t_hw) < 2:
        if N >= 2:
            nb = -(-N // 2)                    # split batch across >=2 steps
        elif HW > _LANE:
            half = -(-HW // 2)
            t_hw = max(_LANE, (-(-half // _LANE)) * _LANE)  # split HW, 128-aligned
    return nb, t_hw


def outconv_1x1(x_nchw, weight, bias):
    """1x1 conv on NCHW input, equivalent to nn.Conv2d(Cin, Cout, kernel_size=1).

    x_nchw: (N, Cin, H, W)
    weight: (Cout, Cin, 1, 1)   (PyTorch layout)
    bias:   (Cout,)
    returns (N, Cout, H, W)
    """
    N, Cin, H, W = x_nchw.shape
    Cout = weight.shape[0]
    HW = H * W

    x = x_nchw.reshape(N, Cin, HW)                      # pure reshape, no transpose
    w_flat = weight.reshape(Cout * Cin).astype(jnp.float32)
    b_flat = bias.reshape(Cout).astype(jnp.float32)

    itemsize = jnp.dtype(x.dtype).itemsize
    nb, t_hw = _pick_tiles(N, Cin, Cout, HW, itemsize)

    grid = (pl.cdiv(N, nb), pl.cdiv(HW, t_hw))

    cost = pl.CostEstimate(
        flops=2 * N * Cout * Cin * HW,
        transcendentals=0,
        bytes_accessed=itemsize * (N * Cin * HW + N * Cout * HW)
        + 4 * (Cout * Cin + Cout),
    )

    out = pl.pallas_call(
        _outconv_kernel,
        out_shape=jax.ShapeDtypeStruct((N, Cout, HW), x.dtype),
        grid_spec=pltpu.PrefetchScalarGridSpec(
            num_scalar_prefetch=0,
            grid=grid,
            in_specs=[
                # tiny weight / bias live in SMEM for scalar broadcast-MAC
                pl.BlockSpec(memory_space=pltpu.MemorySpace.SMEM),
                pl.BlockSpec(memory_space=pltpu.MemorySpace.SMEM),
                # pixel tile: channels-first, pixels on the lane axis;
                # ragged edge blocks (last N-block / last HW-tile) are handled
                # by Pallas partial DMAs — no HBM padding, no output slicing.
                pl.BlockSpec((nb, Cin, t_hw), lambda i, j: (i, 0, j)),
            ],
            out_specs=pl.BlockSpec((nb, Cout, t_hw), lambda i, j: (i, 0, j)),
        ),
        compiler_params=pltpu.CompilerParams(
            dimension_semantics=("parallel", "parallel"),
            vmem_limit_bytes=32 * 1024 * 1024,
        ),
        cost_estimate=cost,
    )(w_flat, b_flat, x)

    return out.reshape(N, Cout, H, W)                   # pure reshape, no transpose


def _reference(x, weight, bias):
    # Exact-f32 reference (no MXU precision ambiguity).
    Cout, Cin = weight.shape[0], weight.shape[1]
    w = weight.reshape(Cout, Cin).astype(jnp.float32)
    y = jnp.sum(x.astype(jnp.float32)[:, None] * w[None, :, :, None, None], axis=2)
    return (y + bias.reshape(1, Cout, 1, 1)).astype(x.dtype)


if __name__ == "__main__":
    key = jax.random.PRNGKey(0)
    k_x, k_w, k_b, k_x2, k_x3 = jax.random.split(key, 5)

    # Module's nominal small shape.
    N, Cin, H, W = 2, 4, 16, 16
    Cout = 3

    # Deterministic parameters in the PyTorch default-init range +-1/sqrt(Cin).
    bound = 1.0 / (Cin ** 0.5)
    weight = jax.random.uniform(k_w, (Cout, Cin, 1, 1), jnp.float32,
                                minval=-bound, maxval=bound)
    bias = jax.random.uniform(k_b, (Cout,), jnp.float32,
                              minval=-bound, maxval=bound)

    # Case 1: nominal shape -> one grid step per image (2 parallel steps).
    x = jax.random.normal(k_x, (N, Cin, H, W), dtype=jnp.float32)
    y = outconv_1x1(x, weight, bias)
    jax.block_until_ready(y)
    assert y.shape == (N, Cout, H, W)
    assert jnp.allclose(y, _reference(x, weight, bias), atol=1e-5, rtol=1e-5)

    # Case 2: N=1, HW=900 (not a multiple of 128) -> split into 2 HW tiles
    # with a ragged tail handled by partial blocks (no padding / slicing).
    x2 = jax.random.normal(k_x2, (1, Cin, 30, 30), dtype=jnp.float32)
    y2 = outconv_1x1(x2, weight, bias)
    jax.block_until_ready(y2)
    assert y2.shape == (1, Cout, 30, 30)
    assert jnp.allclose(y2, _reference(x2, weight, bias), atol=1e-5, rtol=1e-5)

    # Case 3: several tiny images per grid step + a partial batch block.
    x3 = jax.random.normal(k_x3, (5, Cin, 8, 8), dtype=jnp.float32)
    y3 = outconv_1x1(x3, weight, bias)
    jax.block_until_ready(y3)
    assert y3.shape == (5, Cout, 8, 8)
    assert jnp.allclose(y3, _reference(x3, weight, bias), atol=1e-5, rtol=1e-5)

    print("KERNEL_OK")
</pallas_src>

<mosaic_0001>
module attributes {stable_mosaic.version = 11 : i64} {
  func.func @_outconv_kernel(%arg0: i32, %arg1: i32, %arg2: memref<12xf32, #tpu.memory_space<smem>>, %arg3: memref<3xf32, #tpu.memory_space<smem>>, %arg4: memref<1x4x256xf32, #tpu.memory_space<vmem>>, %arg5: memref<1x3x256xf32, #tpu.memory_space<vmem>>) attributes {dimension_semantics = [#tpu.dimension_semantics<parallel>, #tpu.dimension_semantics<parallel>], iteration_bounds = array<i64: 2, 1>, scalar_prefetch = 0 : i64, scratch_operands = 0 : i64, tpu.core_type = #tpu.core_type<tc>, window_params = [{transform_indices = @transform_0, window_bounds = array<i64: 12>}, {transform_indices = @transform_1, window_bounds = array<i64: 3>}, {transform_indices = @transform_2, window_bounds = array<i64: 1, 4, 256>}, {transform_indices = @transform_3, window_bounds = array<i64: 1, 3, 256>}]} {
    %c0 = arith.constant 0 : index
    %c0_0 = arith.constant 0 : index
    %c0_1 = arith.constant 0 : index
    %0 = vector.load %arg4[%c0, %c0_0, %c0_1] : memref<1x4x256xf32, #tpu.memory_space<vmem>>, vector<1x1x256xf32>
    %1 = vector.shape_cast %0 : vector<1x1x256xf32> to vector<1x256xf32>
    %c0_2 = arith.constant 0 : index
    %2 = memref.load %arg2[%c0_2] : memref<12xf32, #tpu.memory_space<smem>>
    %3 = vector.broadcast %2 : f32 to vector<1x256xf32>
    %4 = arith.mulf %1, %3 : vector<1x256xf32>
    %c0_3 = arith.constant 0 : index
    %5 = memref.load %arg3[%c0_3] : memref<3xf32, #tpu.memory_space<smem>>
    %6 = vector.broadcast %5 : f32 to vector<1x256xf32>
    %7 = arith.addf %4, %6 : vector<1x256xf32>
    %c0_4 = arith.constant 0 : index
    %c1 = arith.constant 1 : index
    %c0_5 = arith.constant 0 : index
    %8 = vector.load %arg4[%c0_4, %c1, %c0_5] : memref<1x4x256xf32, #tpu.memory_space<vmem>>, vector<1x1x256xf32>
    %9 = vector.shape_cast %8 : vector<1x1x256xf32> to vector<1x256xf32>
    %c1_6 = arith.constant 1 : index
    %10 = memref.load %arg2[%c1_6] : memref<12xf32, #tpu.memory_space<smem>>
    %11 = vector.broadcast %10 : f32 to vector<1x256xf32>
    %12 = arith.mulf %9, %11 : vector<1x256xf32>
    %13 = arith.addf %7, %12 : vector<1x256xf32>
    %c0_7 = arith.constant 0 : index
    %c2 = arith.constant 2 : index
    %c0_8 = arith.constant 0 : index
    %14 = vector.load %arg4[%c0_7, %c2, %c0_8] : memref<1x4x256xf32, #tpu.memory_space<vmem>>, vector<1x1x256xf32>
    %15 = vector.shape_cast %14 : vector<1x1x256xf32> to vector<1x256xf32>
    %c2_9 = arith.constant 2 : index
    %16 = memref.load %arg2[%c2_9] : memref<12xf32, #tpu.memory_space<smem>>
    %17 = vector.broadcast %16 : f32 to vector<1x256xf32>
    %18 = arith.mulf %15, %17 : vector<1x256xf32>
    %19 = arith.addf %13, %18 : vector<1x256xf32>
    %c0_10 = arith.constant 0 : index
    %c3 = arith.constant 3 : index
    %c0_11 = arith.constant 0 : index
    %20 = vector.load %arg4[%c0_10, %c3, %c0_11] : memref<1x4x256xf32, #tpu.memory_space<vmem>>, vector<1x1x256xf32>
    %21 = vector.shape_cast %20 : vector<1x1x256xf32> to vector<1x256xf32>
    %c3_12 = arith.constant 3 : index
    %22 = memref.load %arg2[%c3_12] : memref<12xf32, #tpu.memory_space<smem>>
    %23 = vector.broadcast %22 : f32 to vector<1x256xf32>
    %24 = arith.mulf %21, %23 : vector<1x256xf32>
    %25 = arith.addf %19, %24 : vector<1x256xf32>
    %c0_13 = arith.constant 0 : index
    %c0_14 = arith.constant 0 : index
    %c0_15 = arith.constant 0 : index
    %26 = vector.load %arg5[%c0_13, %c0_14, %c0_15] : memref<1x3x256xf32, #tpu.memory_space<vmem>>, vector<1x1x256xf32>
    %27 = vector.shape_cast %26 : vector<1x1x256xf32> to vector<1x256xf32>
    %28 = vector.shape_cast %25 : vector<1x256xf32> to vector<1x1x256xf32>
    tpu.vector_store %arg5[%c0_13, %c0_14, %c0_15], %28 {strides = array<i32>} : memref<1x3x256xf32, #tpu.memory_space<vmem>>, vector<1x1x256xf32>,
    %c0_16 = arith.constant 0 : index
    %c0_17 = arith.constant 0 : index
    %c0_18 = arith.constant 0 : index
    %29 = vector.load %arg4[%c0_16, %c0_17, %c0_18] : memref<1x4x256xf32, #tpu.memory_space<vmem>>, vector<1x1x256xf32>
    %30 = vector.shape_cast %29 : vector<1x1x256xf32> to vector<1x256xf32>
    %c4 = arith.constant 4 : index
    %31 = memref.load %arg2[%c4] : memref<12xf32, #tpu.memory_space<smem>>
    %32 = vector.broadcast %31 : f32 to vector<1x256xf32>
    %33 = arith.mulf %30, %32 : vector<1x256xf32>
    %c1_19 = arith.constant 1 : index
    %34 = memref.load %arg3[%c1_19] : memref<3xf32, #tpu.memory_space<smem>>
    %35 = vector.broadcast %34 : f32 to vector<1x256xf32>
    %36 = arith.addf %33, %35 : vector<1x256xf32>
    %c0_20 = arith.constant 0 : index
    %c1_21 = arith.constant 1 : index
    %c0_22 = arith.constant 0 : index
    %37 = vector.load %arg4[%c0_20, %c1_21, %c0_22] : memref<1x4x256xf32, #tpu.memory_space<vmem>>, vector<1x1x256xf32>
    %38 = vector.shape_cast %37 : vector<1x1x256xf32> to vector<1x256xf32>
    %c5 = arith.constant 5 : index
    %39 = memref.load %arg2[%c5] : memref<12xf32, #tpu.memory_space<smem>>
    %40 = vector.broadcast %39 : f32 to vector<1x256xf32>
    %41 = arith.mulf %38, %40 : vector<1x256xf32>
    %42 = arith.addf %36, %41 : vector<1x256xf32>
    %c0_23 = arith.constant 0 : index
    %c2_24 = arith.constant 2 : index
    %c0_25 = arith.constant 0 : index
    %43 = vector.load %arg4[%c0_23, %c2_24, %c0_25] : memref<1x4x256xf32, #tpu.memory_space<vmem>>, vector<1x1x256xf32>
    %44 = vector.shape_cast %43 : vector<1x1x256xf32> to vector<1x256xf32>
    %c6 = arith.constant 6 : index
    %45 = memref.load %arg2[%c6] : memref<12xf32, #tpu.memory_space<smem>>
    %46 = vector.broadcast %45 : f32 to vector<1x256xf32>
    %47 = arith.mulf %44, %46 : vector<1x256xf32>
    %48 = arith.addf %42, %47 : vector<1x256xf32>
    %c0_26 = arith.constant 0 : index
    %c3_27 = arith.constant 3 : index
    %c0_28 = arith.constant 0 : index
    %49 = vector.load %arg4[%c0_26, %c3_27, %c0_28] : memref<1x4x256xf32, #tpu.memory_space<vmem>>, vector<1x1x256xf32>
    %50 = vector.shape_cast %49 : vector<1x1x256xf32> to vector<1x256xf32>
    %c7 = arith.constant 7 : index
    %51 = memref.load %arg2[%c7] : memref<12xf32, #tpu.memory_space<smem>>
    %52 = vector.broadcast %51 : f32 to vector<1x256xf32>
    %53 = arith.mulf %50, %52 : vector<1x256xf32>
    %54 = arith.addf %48, %53 : vector<1x256xf32>
    %c0_29 = arith.constant 0 : index
    %c1_30 = arith.constant 1 : index
    %c0_31 = arith.constant 0 : index
    %55 = vector.load %arg5[%c0_29, %c1_30, %c0_31] : memref<1x3x256xf32, #tpu.memory_space<vmem>>, vector<1x1x256xf32>
    %56 = vector.shape_cast %55 : vector<1x1x256xf32> to vector<1x256xf32>
    %57 = vector.shape_cast %54 : vector<1x256xf32> to vector<1x1x256xf32>
    tpu.vector_store %arg5[%c0_29, %c1_30, %c0_31], %57 {strides = array<i32>} : memref<1x3x256xf32, #tpu.memory_space<vmem>>, vector<1x1x256xf32>,
    %c0_32 = arith.constant 0 : index
    %c0_33 = arith.constant 0 : index
    %c0_34 = arith.constant 0 : index
    %58 = vector.load %arg4[%c0_32, %c0_33, %c0_34] : memref<1x4x256xf32, #tpu.memory_space<vmem>>, vector<1x1x256xf32>
    %59 = vector.shape_cast %58 : vector<1x1x256xf32> to vector<1x256xf32>
    %c8 = arith.constant 8 : index
    %60 = memref.load %arg2[%c8] : memref<12xf32, #tpu.memory_space<smem>>
    %61 = vector.broadcast %60 : f32 to vector<1x256xf32>
    %62 = arith.mulf %59, %61 : vector<1x256xf32>
    %c2_35 = arith.constant 2 : index
    %63 = memref.load %arg3[%c2_35] : memref<3xf32, #tpu.memory_space<smem>>
    %64 = vector.broadcast %63 : f32 to vector<1x256xf32>
    %65 = arith.addf %62, %64 : vector<1x256xf32>
    %c0_36 = arith.constant 0 : index
    %c1_37 = arith.constant 1 : index
    %c0_38 = arith.constant 0 : index
    %66 = vector.load %arg4[%c0_36, %c1_37, %c0_38] : memref<1x4x256xf32, #tpu.memory_space<vmem>>, vector<1x1x256xf32>
    %67 = vector.shape_cast %66 : vector<1x1x256xf32> to vector<1x256xf32>
    %c9 = arith.constant 9 : index
    %68 = memref.load %arg2[%c9] : memref<12xf32, #tpu.memory_space<smem>>
    %69 = vector.broadcast %68 : f32 to vector<1x256xf32>
    %70 = arith.mulf %67, %69 : vector<1x256xf32>
    %71 = arith.addf %65, %70 : vector<1x256xf32>
    %c0_39 = arith.constant 0 : index
    %c2_40 = arith.constant 2 : index
    %c0_41 = arith.constant 0 : index
    %72 = vector.load %arg4[%c0_39, %c2_40, %c0_41] : memref<1x4x256xf32, #tpu.memory_space<vmem>>, vector<1x1x256xf32>
    %73 = vector.shape_cast %72 : vector<1x1x256xf32> to vector<1x256xf32>
    %c10 = arith.constant 10 : index
    %74 = memref.load %arg2[%c10] : memref<12xf32, #tpu.memory_space<smem>>
    %75 = vector.broadcast %74 : f32 to vector<1x256xf32>
    %76 = arith.mulf %73, %75 : vector<1x256xf32>
    %77 = arith.addf %71, %76 : vector<1x256xf32>
    %c0_42 = arith.constant 0 : index
    %c3_43 = arith.constant 3 : index
    %c0_44 = arith.constant 0 : index
    %78 = vector.load %arg4[%c0_42, %c3_43, %c0_44] : memref<1x4x256xf32, #tpu.memory_space<vmem>>, vector<1x1x256xf32>
    %79 = vector.shape_cast %78 : vector<1x1x256xf32> to vector<1x256xf32>
    %c11 = arith.constant 11 : index
    %80 = memref.load %arg2[%c11] : memref<12xf32, #tpu.memory_space<smem>>
    %81 = vector.broadcast %80 : f32 to vector<1x256xf32>
    %82 = arith.mulf %79, %81 : vector<1x256xf32>
    %83 = arith.addf %77, %82 : vector<1x256xf32>
    %c0_45 = arith.constant 0 : index
    %c2_46 = arith.constant 2 : index
    %c0_47 = arith.constant 0 : index
    %84 = vector.load %arg5[%c0_45, %c2_46, %c0_47] : memref<1x3x256xf32, #tpu.memory_space<vmem>>, vector<1x1x256xf32>
    %85 = vector.shape_cast %84 : vector<1x1x256xf32> to vector<1x256xf32>
    %86 = vector.shape_cast %83 : vector<1x256xf32> to vector<1x1x256xf32>
    tpu.vector_store %arg5[%c0_45, %c2_46, %c0_47], %86 {strides = array<i32>} : memref<1x3x256xf32, #tpu.memory_space<vmem>>, vector<1x1x256xf32>,
    return
  }
  func.func @transform_0(%arg0: i32, %arg1: i32) -> i32 {
    %c0_i32 = arith.constant 0 : i32
    %c0_i32_0 = arith.constant 0 : i32
    return %c0_i32 : i32
  }
  func.func @transform_1(%arg0: i32, %arg1: i32) -> i32 {
    %c0_i32 = arith.constant 0 : i32
    %c0_i32_0 = arith.constant 0 : i32
    return %c0_i32 : i32
  }
  func.func @transform_2(%arg0: i32, %arg1: i32) -> (i32, i32, i32) {
    %c0_i32 = arith.constant 0 : i32
    %c0_i32_0 = arith.constant 0 : i32
    return %arg0, %c0_i32, %arg1 : i32, i32, i32
  }
  func.func @transform_3(%arg0: i32, %arg1: i32) -> (i32, i32, i32) {
    %c0_i32 = arith.constant 0 : i32
    %c0_i32_0 = arith.constant 0 : i32
    return %arg0, %c0_i32, %arg1 : i32, i32, i32
  }
}

</mosaic_0001>

<llo_original>
// kernel: tpu_custom_call.1
$region0: #{tpu_custom_call.1}
  #allocation0 [shape = 'u32[]', space=smem, size = 0x4, offset = 0x4, fixed_abs, tag = 'smem constant byte address 0x4 - core index']
  #allocation1 [shape = 'u32[144,128]{1,0:T(1,128)}', space=vmem, size = 0x12000, scoped, tag = 'internal scratch']
  %s0 = inlined_call_operand.hbm [shape: f32[12], index: 0, kind: input, shape index: {}]
  %s1 = inlined_call_operand.vmem [shape: f32[3], index: 1, kind: input, shape index: {}]
  %s2 = inlined_call_operand.hbm [shape: f32[2,4,256], index: 2, kind: input, shape index: {}]
  %s3 = inlined_call_operand.vmem [shape: f32[2,3,256], index: 3, kind: output, shape index: {}]
  %s4 = sld [smem:[#allocation0]]
  $region57: #{tpu_custom_call.1} parent=0
    _
  %s6 = ssub.s32 1, %s4
  %s7 = scalar_select 0, %s6, %s4
  $region1: #{tpu_custom_call.1} parent=0
    #allocation2 [shape = 'u8[512]{0}', space=smem, size = 0x200, scoped, tag = 'input window, operand 0, single buffered']
    #allocation3 [shape = 's32[2]{0}', space=sflag, size = 0x8, scoped, tag = 'scoped memory for tpu_custom_call.1']
    #allocation4 [shape = 's32[2]{0}', space=sflag, size = 0x8, scoped, tag = 'scoped memory for tpu_custom_call.1']
    #allocation5 [shape = 's32[2]{0}', space=sflag, size = 0x8, scoped, tag = 'scoped memory for tpu_custom_call.1']
    #allocation6 [shape = 'u8[512]{0}', space=smem, size = 0x200, scoped, tag = 'input window, operand 1, single buffered']
    #allocation7 [shape = 'u8[8192]{0}', space=vmem, size = 0x2000, scoped, tag = 'input window, operand 2']
    %8 = vsyncpa [#allocation4], 0
    %9 = vsyncpa [#allocation5], 0
    %10 = vsyncpa [#allocation3], 0
    %s11 = scalar_lea.sflag [#allocation3], 1
    %12 = vsyncpa %s11, 0
    loop: start=0, step=1, limit=4
    $region2: #{tpu_custom_call.1} parent=1 // loop_pre_header
      _
    $region3: #{tpu_custom_call.1} parent=1 // loop_header
      %s14 = sphi 0, %s18
      %p15 = scmp.ge.s32.totalorder %s14, 4
      %s21 = sphi 0, %s33
      %s22 = sphi 0, %s29
      %s23 = sphi 0, %s21
      %s24 = sphi 0, %s22
      %s25 = sphi 0, %s23
      %s26 = sphi 0, %s24
      %s34 = sphi 0, %s34
      %s36 = sphi 0, %s34
      %s37 = sphi 0, %s36
      %s51 = sphi 0, %s37
      %s55 = sphi 0, %s55
      %s57 = sphi 0, %s55
      %s58 = sphi 0, %s57
      %s72 = sphi 0, %s58
      %s80 = sphi 0, %s82
      %s83 = sphi 0, %s80
      %s84 = sphi 0, %s83
      %s100 = sphi 0, %s84
      %s108 = sphi 0, %s110
      %s111 = sphi 0, %s108
      %s112 = sphi 0, %s111
      %s128 = sphi 0, %s112
    $region4: #{tpu_custom_call.1} parent=1 // loop_header_branch
      %17 = sbr.rel (%p15) target = $region8
    $region5: #{tpu_custom_call.1} parent=1 // loop_body
      %s19 = ssub.s32 %s14, 1
      %s20 = ssub.s32 %s14, 2
      %s27 = sadd.s32 1, %s22
      %p28 = scmp.ge.s32.totalorder %s27, 1
      %s29 = scalar_select %p28, 0, %s27
      %s30 = sadd.s32 1, %s21
      %s31 = scalar_select %p28, %s30, %s21
      %p32 = scmp.ge.s32.totalorder %s31, 2
      %s33 = scalar_select %p32, 0, %s31
      %s35 = sadd.s32 %s34, 1
      %p38 = scmp.eq.s32.totalorder %s14, 1
      %p39 = scmp.ne.s32.totalorder %s34, %s36
      %p40 = scmp.eq.s32.totalorder %s14, 0
      %p41 = por %p39, %p40
      %p42 = scmp.ne.s32.totalorder %s34, %s36
      %p43 = scmp.eq.s32.totalorder %s19, 1
      %p44 = por %p42, %p43
      %p45 = scmp.ne.s32.totalorder %s36, %s37
      %p46 = scmp.eq.s32.totalorder %s19, 0
      %p47 = por %p45, %p46
      %p48 = scmp.ne.s32.totalorder %s36, %s37
      %p49 = scmp.eq.s32.totalorder %s20, 1
      %p50 = por %p48, %p49
      %p52 = scmp.ne.s32.totalorder %s37, %s51
      %p53 = scmp.eq.s32.totalorder %s20, 0
      %p54 = por %p52, %p53
      %s56 = sadd.s32 %s55, 1
      %p59 = scmp.eq.s32.totalorder %s14, 1
      %p60 = scmp.ne.s32.totalorder %s55, %s57
      %p61 = scmp.eq.s32.totalorder %s14, 0
      %p62 = por %p60, %p61
      %p63 = scmp.ne.s32.totalorder %s55, %s57
      %p64 = scmp.eq.s32.totalorder %s19, 1
      %p65 = por %p63, %p64
      %p66 = scmp.ne.s32.totalorder %s57, %s58
      %p67 = scmp.eq.s32.totalorder %s19, 0
      %p68 = por %p66, %p67
      %p69 = scmp.ne.s32.totalorder %s57, %s58
      %p70 = scmp.eq.s32.totalorder %s20, 1
      %p71 = por %p69, %p70
      %p73 = scmp.ne.s32.totalorder %s58, %s72
      %p74 = scmp.eq.s32.totalorder %s20, 0
      %p75 = por %p73, %p74
      %s76 = ssub.s32 %s21, %s33
      %s77 = ssub.s32 %s22, %s29
      %s78 = sor.u32 %s76, %s77
      %p79 = scmp.eq.s32.totalorder %s78, 0
      %s81 = sadd.s32 %s80, 1
      %s82 = scalar_select %p79, %s80, %s81
      %p85 = pneg %p79
      %p86 = scmp.eq.s32.totalorder %s14, 1
      %p87 = por %p85, %p86
      %p88 = scmp.ne.s32.totalorder %s80, %s83
      %p89 = scmp.eq.s32.totalorder %s14, 0
      %p90 = por %p88, %p89
      %p91 = scmp.ne.s32.totalorder %s80, %s83
      %p92 = scmp.eq.s32.totalorder %s19, 1
      %p93 = por %p91, %p92
      %p94 = scmp.ne.s32.totalorder %s83, %s84
      %p95 = scmp.eq.s32.totalorder %s19, 0
      %p96 = por %p94, %p95
      %p97 = scmp.ne.s32.totalorder %s83, %s84
      %p98 = scmp.eq.s32.totalorder %s20, 1
      %p99 = por %p97, %p98
      %p101 = scmp.ne.s32.totalorder %s84, %s100
      %p102 = scmp.eq.s32.totalorder %s20, 0
      %p103 = por %p101, %p102
      %s104 = ssub.s32 %s21, %s33
      %s105 = ssub.s32 %s22, %s29
      %s106 = sor.u32 %s104, %s105
      %p107 = scmp.eq.s32.totalorder %s106, 0
      %s109 = sadd.s32 %s108, 1
      %s110 = scalar_select %p107, %s108, %s109
      %p113 = pneg %p107
      %p114 = scmp.eq.s32.totalorder %s14, 1
      %p115 = por %p113, %p114
      %p116 = scmp.ne.s32.totalorder %s108, %s111
      %p117 = scmp.eq.s32.totalorder %s14, 0
      %p118 = por %p116, %p117
      %p119 = scmp.ne.s32.totalorder %s108, %s111
      %p120 = scmp.eq.s32.totalorder %s19, 1
      %p121 = por %p119, %p120
      %p122 = scmp.ne.s32.totalorder %s111, %s112
      %p123 = scmp.eq.s32.totalorder %s19, 0
      %p124 = por %p122, %p123
      %p125 = scmp.ne.s32.totalorder %s111, %s112
      %p126 = scmp.eq.s32.totalorder %s20, 1
      %p127 = por %p125, %p126
      %p129 = scmp.ne.s32.totalorder %s112, %s128
      %p130 = scmp.eq.s32.totalorder %s20, 0
      %p131 = por %p129, %p130
      %p132 = scmp.le.s32.totalorder 1, %s14
      %p133 = scmp.lt.s32.totalorder %s14, 3
      %p134 = pnand %p132, %p133
      %p135 = pneg %p134
      // Predicated region
      $region9: #{tpu_custom_call.1} parent=5 // pred_check
        _
      $region10: #{tpu_custom_call.1} parent=5 // pred_check_branch
        %137 = sbr.rel (%p134) target = $region12
      $region11: #{tpu_custom_call.1} parent=5 // pred_region
        %s138 = ssub.s32 %s14, 1
        // Predicated region
        $region13: #{tpu_custom_call.1} parent=11 // pred_check
          %p139 = pneg %p47
        $region14: #{tpu_custom_call.1} parent=11 // pred_check_branch
          %141 = sbr.rel (%p139) target = $region16
        $region15: #{tpu_custom_call.1} parent=11 // pred_region
          %s143 = ssub.s32 16, 16
          %144 = vsyncadd [#allocation4], %s143
          %147 = dma.hbm_to_smem %s0, 16, [#allocation2], [#allocation4]
        $region16: #{tpu_custom_call.1} parent=11 // pred_fallthru
          _
        // Predicated region
        $region17: #{tpu_custom_call.1} parent=11 // pred_check
          %p148 = pneg %p68
        $region18: #{tpu_custom_call.1} parent=11 // pred_check_branch
          %150 = sbr.rel (%p148) target = $region20
        $region19: #{tpu_custom_call.1} parent=11 // pred_region
          %s152 = ssub.s32 16, 16
          %153 = vsyncadd [#allocation5], %s152
          %s155 = sshll.u32 %s1, 4
          %s156 = int_to_ptr.vmem [resolvable:$true] %s155
          %158 = dma.vmem_to_smem %s156, 16, [#allocation6], [#allocation5]
        $region20: #{tpu_custom_call.1} parent=11 // pred_fallthru
          _
      $region12: #{tpu_custom_call.1} parent=5 // pred_fallthru
        _
      %p159 = scmp.lt.s32.totalorder %s14, 2
      // Predicated region
      $region21: #{tpu_custom_call.1} parent=5 // pred_check
        %p160 = pneg %p159
      $region22: #{tpu_custom_call.1} parent=5 // pred_check_branch
        %162 = sbr.rel (%p160) target = $region24
      $region23: #{tpu_custom_call.1} parent=5 // pred_region
        // Predicated region
        $region25: #{tpu_custom_call.1} parent=23 // pred_check
          %p163 = pneg %p90
        $region26: #{tpu_custom_call.1} parent=23 // pred_check_branch
          %165 = sbr.rel (%p163) target = $region28
        $region27: #{tpu_custom_call.1} parent=23 // pred_region
          %s166 = sand.u32 %s80, 1
          %s167 = scalar_lea.sflag [#allocation3], %s166
          %s168 = sand.u32 %s80, 1
          %s169 = smul.addr %s168, 8
          %s170 = scalar_lea.vmem [#allocation7], %s169
          %s171 = smul.u32 2, %s22
          %s173 = ssub.s32 128, 128
          %174 = vsyncadd %s167, %s173
          %s175 = smul.addr %s21, 2
          %s176 = sadd.s32 %s171, %s175
          %s177 = smul.addr %s176, 64
          %s178 = scalar_lea.hbm %s2, %s177
          %s180 = sshll.u32 %s170, 4
          %s181 = int_to_ptr.vmem [resolvable:$true] %s180
          %183 = dma.hbm_to_vmem [thread:$0]  %s178, 128, %s181, %s167
        $region28: #{tpu_custom_call.1} parent=23 // pred_fallthru
          _
      $region24: #{tpu_custom_call.1} parent=5 // pred_fallthru
        _
      %p184 = scmp.le.s32.totalorder 1, %s14
      %p185 = scmp.lt.s32.totalorder %s14, 3
      %p186 = pnand %p184, %p185
      %p187 = pneg %p186
      // Predicated region
      $region29: #{tpu_custom_call.1} parent=5 // pred_check
        _
      $region30: #{tpu_custom_call.1} parent=5 // pred_check_branch
        %189 = sbr.rel (%p186) target = $region32
      $region31: #{tpu_custom_call.1} parent=5 // pred_region
        %s190 = ssub.s32 %s14, 1
        // Predicated region
        $region33: #{tpu_custom_call.1} parent=31 // pred_check
          %p191 = pneg %p47
        $region34: #{tpu_custom_call.1} parent=31 // pred_check_branch
          %193 = sbr.rel (%p191) target = $region36
        $region35: #{tpu_custom_call.1} parent=31 // pred_region
          %194 = dma.done [#allocation4], 16
        $region36: #{tpu_custom_call.1} parent=31 // pred_fallthru
          _
        // Predicated region
        $region37: #{tpu_custom_call.1} parent=31 // pred_check
          %p195 = pneg %p68
        $region38: #{tpu_custom_call.1} parent=31 // pred_check_branch
          %197 = sbr.rel (%p195) target = $region40
        $region39: #{tpu_custom_call.1} parent=31 // pred_region
          %198 = dma.done [#allocation5], 16
        $region40: #{tpu_custom_call.1} parent=31 // pred_fallthru
          _
        %s199 = sand.u32 %s83, 1
        %s200 = scalar_lea.sflag [#allocation3], %s199
        %s201 = sand.u32 %s83, 1
        %s202 = smul.addr %s201, 8
        %s203 = scalar_lea.vmem [#allocation7], %s202
        // Predicated region
        $region41: #{tpu_custom_call.1} parent=31 // pred_check
          %p204 = pneg %p96
        $region42: #{tpu_custom_call.1} parent=31 // pred_check_branch
          %206 = sbr.rel (%p204) target = $region44
        $region43: #{tpu_custom_call.1} parent=31 // pred_region
          %207 = dma.done %s200, 128
        $region44: #{tpu_custom_call.1} parent=31 // pred_fallthru
          _
        %208 = sfence
        %p209 = pneg %p47
        %p210 = pneg %p44
        %p211 = pneg %p68
        %p212 = pneg %p65
        %s213 = sand.u32 %s83, 1
        %s214 = scalar_lea.sflag [#allocation3], %s213
        %s215 = sand.u32 %s83, 1
        %s216 = smul.addr %s215, 8
        %s217 = scalar_lea.vmem [#allocation7], %s216
        %p218 = pneg %p96
        %p219 = pneg %p93
        %p220 = pneg %p124
        %p221 = pneg %p121
        %s222 = smul.u32 2, %s24
        %p223 = scmp.lt.s32.totalorder %s23, 1
        %s224 = scalar_select %p223, %s23, 1
        %p225 = scmp.lt.s32.totalorder %s222, 1
        %s226 = scalar_select %p225, %s222, 1
        %s227 = smul.addr %s224, 2
        %s228 = sadd.s32 %s226, %s227
        %s229 = smul.addr %s228, 4
        %s230 = scalar_lea.vmem %s3, %s229
        %s231 = smul.u32 2, %s24
        %s232 = smul.u32 2, %s24
        %p233 = scmp.lt.s32.totalorder %s23, 1
        %s234 = scalar_select %p233, %s23, 1
        %p235 = scmp.lt.s32.totalorder %s232, 1
        %s236 = scalar_select %p235, %s232, 1
        %s237 = smul.addr %s234, 2
        %s238 = sadd.s32 %s236, %s237
        %s239 = smul.addr %s238, 4
        %s240 = scalar_lea.vmem %s3, %s239
        %s241 = smul.u32 2, %s24
        %v242 = vld [vmem:[%s203] ss:$4 sm:$0x3]
        %s243 = sld [smem:[#allocation2]]
        %v244 = vstv %s243
        %v245 = vmul.f32 %v242, %v244
        %s246 = sld [smem:[#allocation6]]
        %v247 = vstv %s246
        %v248 = vadd.f32 %v245, %v247
        %s249 = scalar_lea.vmem %s203, 1 [#allocation7]
        %v250 = vld [vmem:[%s249] ss:$4 sm:$0x3]
        %s251 = sld [smem:[#allocation2 + $0x1]]
        %v252 = vstv %s251
        %v253 = vmul.f32 %v250, %v252
        %v254 = vadd.f32 %v248, %v253
        %s255 = scalar_lea.vmem %s203, 2 [#allocation7]
        %v256 = vld [vmem:[%s255] ss:$4 sm:$0x3]
        %s257 = sld [smem:[#allocation2 + $0x2]]
        %v258 = vstv %s257
        %v259 = vmul.f32 %v256, %v258
        %v260 = vadd.f32 %v254, %v259
        %s261 = scalar_lea.vmem %s203, 3 [#allocation7]
        %v262 = vld [vmem:[%s261] ss:$4 sm:$0x3]
        %s263 = sld [smem:[#allocation2 + $0x3]]
        %v264 = vstv %s263
        %v265 = vmul.f32 %v262, %v264
        %v266 = vadd.f32 %v260, %v265
        %v267 = vlaneseq
        %vm268 = vcmp.ge.s32.totalorder %v267, 0
        %vm269 = vcmp.lt.s32.totalorder %v267, 256
        %vm270 = vmand %vm268, %vm269
        %271 = vst.msk [vmem:[%s240] ss:$4 sm:$0x3] %vm270, %v266
        %v272 = vld [vmem:[%s203] ss:$4 sm:$0x3]
        %s273 = sld [smem:[#allocation2 + $0x4]]
        %v274 = vstv %s273
        %v275 = vmul.f32 %v272, %v274
        %s276 = sld [smem:[#allocation6 + $0x1]]
        %v277 = vstv %s276
        %v278 = vadd.f32 %v275, %v277
        %v279 = vld [vmem:[%s249] ss:$4 sm:$0x3]
        %s280 = sld [smem:[#allocation2 + $0x5]]
        %v281 = vstv %s280
        %v282 = vmul.f32 %v279, %v281
        %v283 = vadd.f32 %v278, %v282
        %v284 = vld [vmem:[%s255] ss:$4 sm:$0x3]
        %s285 = sld [smem:[#allocation2 + $0x6]]
        %v286 = vstv %s285
        %v287 = vmul.f32 %v284, %v286
        %v288 = vadd.f32 %v283, %v287
        %v289 = vld [vmem:[%s261] ss:$4 sm:$0x3]
        %s290 = sld [smem:[#allocation2 + $0x7]]
        %v291 = vstv %s290
        %v292 = vmul.f32 %v289, %v291
        %v293 = vadd.f32 %v288, %v292
        %s294 = scalar_lea.vmem %s240, 1
        %295 = vst.msk [vmem:[%s294] ss:$4 sm:$0x3] %vm270, %v293
        %v296 = vld [vmem:[%s203] ss:$4 sm:$0x3]
        %s297 = sld [smem:[#allocation2 + $0x8]]
        %v298 = vstv %s297
        %v299 = vmul.f32 %v296, %v298
        %s300 = sld [smem:[#allocation6 + $0x2]]
        %v301 = vstv %s300
        %v302 = vadd.f32 %v299, %v301
        %v303 = vld [vmem:[%s249] ss:$4 sm:$0x3]
        %s304 = sld [smem:[#allocation2 + $0x9]]
        %v305 = vstv %s304
        %v306 = vmul.f32 %v303, %v305
        %v307 = vadd.f32 %v302, %v306
        %v308 = vld [vmem:[%s255] ss:$4 sm:$0x3]
        %s309 = sld [smem:[#allocation2 + $0xa]]
        %v310 = vstv %s309
        %v311 = vmul.f32 %v308, %v310
        %v312 = vadd.f32 %v307, %v311
        %v313 = vld [vmem:[%s261] ss:$4 sm:$0x3]
        %s314 = sld [smem:[#allocation2 + $0xb]]
        %v315 = vstv %s314
        %v316 = vmul.f32 %v313, %v315
        %v317 = vadd.f32 %v312, %v316
        %s318 = scalar_lea.vmem %s240, 2
        %319 = vst.msk [vmem:[%s318] ss:$4 sm:$0x3] %vm270, %v317
        %s320 = smul.u32 2, %s24
        %p321 = scmp.lt.s32.totalorder %s23, 1
        %s322 = scalar_select %p321, %s23, 1
        %p323 = scmp.lt.s32.totalorder %s320, 1
        %s324 = scalar_select %p323, %s320, 1
        %s325 = smul.addr %s322, 2
        %s326 = sadd.s32 %s324, %s325
        %s327 = smul.addr %s326, 4
        %s328 = scalar_lea.vmem %s3, %s327
        // Predicated region
        $region45: #{tpu_custom_call.1} parent=31 // pred_check
          %p329 = pneg %p121
        $region46: #{tpu_custom_call.1} parent=31 // pred_check_branch
          %331 = sbr.rel (%p329) target = $region48
        $region47: #{tpu_custom_call.1} parent=31 // pred_region
          %s332 = smul.u32 2, %s24
        $region48: #{tpu_custom_call.1} parent=31 // pred_fallthru
          _
      $region32: #{tpu_custom_call.1} parent=5 // pred_fallthru
        _
      %p333 = scmp.le.s32.totalorder 2, %s14
      // Predicated region
      $region49: #{tpu_custom_call.1} parent=5 // pred_check
        %p334 = pneg %p333
      $region50: #{tpu_custom_call.1} parent=5 // pred_check_branch
        %336 = sbr.rel (%p334) target = $region52
      $region51: #{tpu_custom_call.1} parent=5 // pred_region
        %s337 = ssub.s32 %s14, 2
        // Predicated region
        $region53: #{tpu_custom_call.1} parent=51 // pred_check
          %p338 = pneg %p127
        $region54: #{tpu_custom_call.1} parent=51 // pred_check_branch
          %340 = sbr.rel (%p338) target = $region56
        $region55: #{tpu_custom_call.1} parent=51 // pred_region
          %s341 = smul.u32 2, %s26
          %p342 = scmp.lt.s32.totalorder %s25, 1
          %s343 = scalar_select %p342, %s25, 1
          %p344 = scmp.lt.s32.totalorder %s341, 1
          %s345 = scalar_select %p344, %s341, 1
          %s346 = smul.addr %s343, 2
          %s347 = sadd.s32 %s345, %s346
          %s348 = smul.addr %s347, 4
          %s349 = scalar_lea.vmem %s3, %s348
        $region56: #{tpu_custom_call.1} parent=51 // pred_fallthru
          _
      $region52: #{tpu_custom_call.1} parent=5 // pred_fallthru
        _
    $region6: #{tpu_custom_call.1} parent=1 // loop_footer
      %s18 = sadd.s32 1, %s14
    $region7: #{tpu_custom_call.1} parent=1 // loop_footer_branch
      %13 = sbr.rel target = $region3
    $region8: #{tpu_custom_call.1} parent=1 // loop_exit
      _
    %350 = vsyncpa [#allocation3], 1
    %s351 = scalar_lea.sflag [#allocation3], 1
    %352 = vsyncpa %s351, 1
    %353 = vsyncpa [#allocation4], 1
    %s354 = scalar_lea.sflag [#allocation4], 1
    %355 = vsyncpa %s354, 1
    %356 = vsyncpa [#allocation5], 1
    %s357 = scalar_lea.sflag [#allocation5], 1
    %358 = vsyncpa %s357, 1

</llo_original>
